<compile_context>
chip_gen: v7x
topology: tpu7x:2x2x1
jax: 0.10.0
libtpu: 0.0.40
codegen_flags: <defaults>
</compile_context>

<pallas_src>
import jax
import jax.numpy as jnp
import numpy as np
from jax import lax
from jax.experimental import pallas as pl
from jax.experimental.pallas import tpu as pltpu

LANES = 128
SUBLANES = 8
_CHUNK_ROWS = 256          # rows reduced per inner fori_loop step (32 vregs/input)


def _cdiv(a, b):
    return -(-a // b)


def _round_up(a, b):
    return _cdiv(a, b) * b


def _chip_kind():
    try:
        return (jax.devices()[0].device_kind or "").lower()
    except Exception:
        return ""


def _row_align(dtype):
    # Second-to-last block dim must be a multiple of 8 (4-byte dtypes),
    # 16 (2-byte, e.g. bf16) or 32 (1-byte, e.g. int8) due to sublane packing.
    return max(SUBLANES, 32 // max(1, np.dtype(dtype).itemsize))


def _make_kernel(*, n, tile_rows, chunk_rows, tiles_per_core):
    full_rows = n // LANES          # rows that are entirely valid
    rem_lanes = n % LANES           # valid lanes in row `full_rows` (0 -> none)
    chunks_full = tile_rows // chunk_rows
    tail_rows = tile_rows - chunks_full * chunk_rows   # static, multiple of 8 (or 0)

    def _chunk_partial(x_ref, y_ref, row_off, nrows, tile_row0, masked):
        x = x_ref[pl.ds(row_off, nrows), :].astype(jnp.float32)
        y = y_ref[pl.ds(row_off, nrows), :].astype(jnp.float32)
        z = x * y
        # Stable softplus(-z) == log(1 + exp(-z)): no overflow for z << 0,
        # keeps precision for z >> 0 (log1p).  Matches the torch formula.
        loss = jnp.maximum(-z, 0.0) + jnp.log1p(jnp.exp(-jnp.abs(z)))
        if masked:
            row = tile_row0 + row_off + lax.broadcasted_iota(jnp.int32, loss.shape, 0)
            lane = lax.broadcasted_iota(jnp.int32, loss.shape, 1)
            valid = (row < full_rows) | ((row == full_rows) & (lane < rem_lanes))
            loss = jnp.where(valid, loss, 0.0)
        # (nrows,128) -> (nrows//8, 8, 128) summed over axis 0: vreg-wise VPU
        # adds only, no per-step cross-lane XLU reduce.
        return loss.reshape(nrows // SUBLANES, SUBLANES, LANES).sum(axis=0)

    def kernel(x_ref, y_ref, out_ref):
        c = pl.program_id(0)
        j = pl.program_id(1)

        @pl.when(j == 0)
        def _():
            out_ref[...] = jnp.zeros_like(out_ref)

        tile_row0 = (c * tiles_per_core + j) * tile_rows

        def _tile_sum(masked):
            def body(i, acc):
                off = pl.multiple_of(i * chunk_rows, chunk_rows)
                return acc + _chunk_partial(x_ref, y_ref, off, chunk_rows,
                                            tile_row0, masked)
            acc = lax.fori_loop(0, chunks_full, body,
                                jnp.zeros((SUBLANES, LANES), jnp.float32))
            if tail_rows:
                acc = acc + _chunk_partial(x_ref, y_ref, chunks_full * chunk_rows,
                                           tail_rows, tile_row0, masked)
            return acc

        # Only tiles reaching past the last fully-valid row pay the masking
        # cost (iota + compare + select); all other tiles run mask-free.
        needs_mask = (tile_row0 + tile_rows) > full_rows

        @pl.when(jnp.logical_not(needs_mask))
        def _():
            out_ref[...] += _tile_sum(False)[None]

        @pl.when(needs_mask)
        def _():
            out_ref[...] += _tile_sum(True)[None]

    return kernel


def logistic_loss(x, y, *, tile_rows=None, num_cores=None):
    """mean(log(1 + exp(-x * y))) via a Pallas TPU kernel.

    Inputs are consumed in their own dtype (e.g. bf16 logits, int8 labels) and
    upcast to f32 inside the kernel, so narrow inputs directly reduce HBM
    traffic for this memory-bound reduction.
    """
    assert x.shape == y.shape, "x and y must have the same shape"
    n = int(x.size)
    assert n > 0

    kind = _chip_kind()
    if tile_rows is None:
        tile_rows = 8192 if "v7" in kind else 4096
    if num_cores is None:
        num_cores = 2 if "v7" in kind else 1

    xf = x.reshape(-1)
    yf = y.reshape(-1)

    rows = _cdiv(n, LANES)
    row_align = max(_row_align(x.dtype), _row_align(y.dtype))

    # Don't spread tiny inputs across cores.
    num_cores = max(1, min(num_cores, rows // row_align))

    # Pick the tile count first, then shrink the tile so grid over-read past
    # the array end is < row_align rows per tile (handled by in-kernel masking
    # instead of padding the inputs in HBM).
    rows_per_core = _round_up(_cdiv(rows, num_cores), row_align)
    tiles_per_core = _cdiv(rows_per_core, tile_rows)
    tr = _round_up(_cdiv(rows_per_core, tiles_per_core), row_align)
    chunk_rows = min(_CHUNK_ROWS, tr)

    # Physical padding only when unavoidable:
    #   * numel % 128 != 0 (lane tail), or
    #   * the whole input is smaller than one tile (keeps block <= array rows).
    # TODO(synk): the lane-tail case still copies both flat inputs once; inputs
    # whose element count is a multiple of 128 take the zero-copy path.
    rows_padded = tr if tr > rows else rows
    padded_n = rows_padded * LANES
    if padded_n != n:
        pad = padded_n - n
        xf = jnp.concatenate([xf, jnp.zeros((pad,), xf.dtype)])
        yf = jnp.concatenate([yf, jnp.zeros((pad,), yf.dtype)])

    x2 = xf.reshape(rows_padded, LANES)
    y2 = yf.reshape(rows_padded, LANES)

    total_blocks = num_cores * tiles_per_core
    num_valid_blocks = _cdiv(rows, tr)
    if total_blocks > num_valid_blocks:
        # Pathological rounding case: clamp so no DMA starts past the array
        # end; duplicated reads are fully masked in-kernel.
        def in_map(c, j):
            return (jnp.minimum(c * tiles_per_core + j, num_valid_blocks - 1), 0)
    else:
        def in_map(c, j):
            return (c * tiles_per_core + j, 0)

    def out_map(c, j):
        return (c, 0, 0)

    kernel = _make_kernel(n=n, tile_rows=tr, chunk_rows=chunk_rows,
                          tiles_per_core=tiles_per_core)

    bytes_accessed = (x2.size * x2.dtype.itemsize + y2.size * y2.dtype.itemsize
                      + num_cores * SUBLANES * LANES * 4)

    partials = pl.pallas_call(
        kernel,
        out_shape=jax.ShapeDtypeStruct((num_cores, SUBLANES, LANES), jnp.float32),
        grid_spec=pltpu.PrefetchScalarGridSpec(
            num_scalar_prefetch=0,
            grid=(num_cores, tiles_per_core),
            in_specs=[
                pl.BlockSpec((tr, LANES), in_map),
                pl.BlockSpec((tr, LANES), in_map),
            ],
            out_specs=pl.BlockSpec((1, SUBLANES, LANES), out_map),
        ),
        # TODO(synk): on v7x, verify via xprof that axis 0 shards across both
        # TensorCores; if a single TC is active, switch to pltpu.CORE_PARALLEL.
        compiler_params=pltpu.CompilerParams(
            dimension_semantics=("parallel", "arbitrary"),
        ),
        cost_estimate=pl.CostEstimate(
            flops=6 * n,
            transcendentals=2 * n,
            bytes_accessed=bytes_accessed,
        ),
    )(x2, y2)

    # Tiny final reduce (num_cores*8*128 elements) + mean normalization.
    return jnp.sum(partials) / jnp.float32(n)


if __name__ == "__main__":
    key = jax.random.PRNGKey(0)
    kx, ky = jax.random.split(key)

    # Shapes consistent with the module (elementwise loss over any shape).
    x = jax.random.normal(kx, (2, 4, 16, 16), dtype=jnp.float32)
    y = jnp.where(jax.random.normal(ky, (2, 4, 16, 16)) >= 0, 1.0, -1.0).astype(jnp.float32)

    loss = logistic_loss(x, y)
    jax.block_until_ready(loss)
    ref = jnp.mean(jnp.log(1.0 + jnp.exp(-x * y)))
    assert jnp.allclose(loss, ref, rtol=1e-5, atol=1e-6), (loss, ref)

    # Awkward element count: exercises the lane-tail + in-kernel masking path.
    xa = jax.random.normal(kx, (3, 5, 7), dtype=jnp.float32)
    ya = jnp.where(jax.random.normal(ky, (3, 5, 7)) >= 0, 1.0, -1.0).astype(jnp.float32)
    loss2 = logistic_loss(xa, ya)
    jax.block_until_ready(loss2)
    ref2 = jnp.mean(jnp.log(1.0 + jnp.exp(-xa * ya)))
    assert jnp.allclose(loss2, ref2, rtol=1e-5, atol=1e-6), (loss2, ref2)

    # Narrow-dtype path (bf16 logits, int8 labels): kernel upcasts in VMEM.
    xb = jax.random.normal(kx, (2, 16, 128), dtype=jnp.bfloat16)
    yb = jnp.where(jax.random.normal(ky, (2, 16, 128)) >= 0, 1, -1).astype(jnp.int8)
    loss3 = logistic_loss(xb, yb)
    jax.block_until_ready(loss3)
    ref3 = jnp.mean(jnp.log(1.0 + jnp.exp(-(xb.astype(jnp.float32) * yb.astype(jnp.float32)))))
    assert jnp.allclose(loss3, ref3, rtol=1e-5, atol=1e-6), (loss3, ref3)

    print("KERNEL_OK")
</pallas_src>

<mosaic_0001>
module attributes {stable_mosaic.version = 11 : i64} {
  func.func @kernel(%arg0: i32, %arg1: i32, %arg2: memref<16x128xf32, #tpu.memory_space<vmem>>, %arg3: memref<16x128xf32, #tpu.memory_space<vmem>>, %arg4: memref<1x8x128xf32, #tpu.memory_space<vmem>>) attributes {dimension_semantics = [#tpu.dimension_semantics<parallel>, #tpu.dimension_semantics<arbitrary>], iteration_bounds = array<i64: 1, 1>, scalar_prefetch = 0 : i64, scratch_operands = 0 : i64, tpu.core_type = #tpu.core_type<tc>, window_params = [{transform_indices = @transform_0, window_bounds = array<i64: 16, 128>}, {transform_indices = @transform_1, window_bounds = array<i64: 16, 128>}, {transform_indices = @transform_2, window_bounds = array<i64: 1, 8, 128>}]} {
    %c0_i32 = arith.constant 0 : i32
    %0 = arith.cmpi eq, %arg1, %c0_i32 : i32
    %1 = arith.extui %0 : i1 to i32
    %c0_i32_0 = arith.constant 0 : i32
    %2 = arith.cmpi ne, %1, %c0_i32_0 : i32
    scf.if %2 {
      %cst = arith.constant 0.000000e+00 : f32
      %13 = vector.broadcast %cst : f32 to vector<1x8x128xf32>
      %c0 = arith.constant 0 : index
      %c0_5 = arith.constant 0 : index
      %c0_6 = arith.constant 0 : index
      %14 = vector.load %arg4[%c0, %c0_5, %c0_6] : memref<1x8x128xf32, #tpu.memory_space<vmem>>, vector<1x8x128xf32>
      tpu.vector_store %arg4[%c0, %c0_5, %c0_6], %13 {strides = array<i32>} : memref<1x8x128xf32, #tpu.memory_space<vmem>>, vector<1x8x128xf32>,
    } else {
    }
    %c1_i32 = arith.constant 1 : i32
    %3 = arith.muli %arg0, %c1_i32 : i32
    %4 = arith.addi %3, %arg1 : i32
    %c16_i32 = arith.constant 16 : i32
    %5 = arith.muli %4, %c16_i32 : i32
    %c16_i32_1 = arith.constant 16 : i32
    %6 = arith.addi %5, %c16_i32_1 : i32
    %c16_i32_2 = arith.constant 16 : i32
    %7 = arith.cmpi sgt, %6, %c16_i32_2 : i32
    %true = arith.constant true
    %8 = arith.xori %7, %true : i1
    %9 = arith.extui %8 : i1 to i32
    %c0_i32_3 = arith.constant 0 : i32
    %10 = arith.cmpi ne, %9, %c0_i32_3 : i32
    scf.if %10 {
      %c0 = arith.constant 0 : index
      %c0_5 = arith.constant 0 : index
      %c0_6 = arith.constant 0 : index
      %13 = vector.load %arg4[%c0, %c0_5, %c0_6] : memref<1x8x128xf32, #tpu.memory_space<vmem>>, vector<1x8x128xf32>
      %cst = arith.constant 0.000000e+00 : f32
      %14 = vector.broadcast %cst : f32 to vector<8x128xf32>
      %c0_i32_7 = arith.constant 0 : i32
      %c16_i32_8 = arith.constant 16 : i32
      %15 = arith.muli %c0_i32_7, %c16_i32_8 : i32
      %16 = tpu.assume_multiple %15, 16 : i32
      %17 = arith.index_cast %16 : i32 to index
      %c0_9 = arith.constant 0 : index
      %18 = vector.load %arg2[%17, %c0_9] : memref<16x128xf32, #tpu.memory_space<vmem>>, vector<16x128xf32>
      %19 = arith.index_cast %16 : i32 to index
      %c0_10 = arith.constant 0 : index
      %20 = vector.load %arg3[%19, %c0_10] : memref<16x128xf32, #tpu.memory_space<vmem>>, vector<16x128xf32>
      %21 = arith.mulf %18, %20 : vector<16x128xf32>
      %cst_11 = arith.constant 0.000000e+00 : f32
      %22 = vector.broadcast %cst_11 : f32 to vector<16x128xf32>
      %23 = arith.subf %22, %21 : vector<16x128xf32>
      %cst_12 = arith.constant 0.000000e+00 : f32
      %24 = vector.broadcast %cst_12 : f32 to vector<16x128xf32>
      %25 = arith.maximumf %23, %24 : vector<16x128xf32>
      %26 = math.absf %21 : vector<16x128xf32>
      %cst_13 = arith.constant 0.000000e+00 : f32
      %27 = vector.broadcast %cst_13 : f32 to vector<16x128xf32>
      %28 = arith.subf %27, %26 : vector<16x128xf32>
      %29 = math.exp %28 : vector<16x128xf32>
      %30 = math.log1p %29 : vector<16x128xf32>
      %31 = arith.addf %25, %30 : vector<16x128xf32>
      %32 = vector.shape_cast %31 : vector<16x128xf32> to vector<2x8x128xf32>
      %cst_14 = arith.constant dense<0.000000e+00> : vector<8x128xf32>
      %33 = vector.multi_reduction <add>, %32, %cst_14 [0] : vector<2x8x128xf32> to vector<8x128xf32>
      %34 = arith.addf %14, %33 : vector<8x128xf32>
      %c1_i32_15 = arith.constant 1 : i32
      %35 = vector.shape_cast %34 : vector<8x128xf32> to vector<1x8x128xf32>
      %36 = arith.addf %13, %35 : vector<1x8x128xf32>
      %c0_16 = arith.constant 0 : index
      %c0_17 = arith.constant 0 : index
      %c0_18 = arith.constant 0 : index
      %37 = vector.load %arg4[%c0_16, %c0_17, %c0_18] : memref<1x8x128xf32, #tpu.memory_space<vmem>>, vector<1x8x128xf32>
      tpu.vector_store %arg4[%c0_16, %c0_17, %c0_18], %36 {strides = array<i32>} : memref<1x8x128xf32, #tpu.memory_space<vmem>>, vector<1x8x128xf32>,
    } else {
    }
    %11 = arith.extui %7 : i1 to i32
    %c0_i32_4 = arith.constant 0 : i32
    %12 = arith.cmpi ne, %11, %c0_i32_4 : i32
    scf.if %12 {
      %c0 = arith.constant 0 : index
      %c0_5 = arith.constant 0 : index
      %c0_6 = arith.constant 0 : index
      %13 = vector.load %arg4[%c0, %c0_5, %c0_6] : memref<1x8x128xf32, #tpu.memory_space<vmem>>, vector<1x8x128xf32>
      %cst = arith.constant 0.000000e+00 : f32
      %14 = vector.broadcast %cst : f32 to vector<8x128xf32>
      %c0_i32_7 = arith.constant 0 : i32
      %c16_i32_8 = arith.constant 16 : i32
      %15 = arith.muli %c0_i32_7, %c16_i32_8 : i32
      %16 = tpu.assume_multiple %15, 16 : i32
      %17 = arith.index_cast %16 : i32 to index
      %c0_9 = arith.constant 0 : index
      %18 = vector.load %arg2[%17, %c0_9] : memref<16x128xf32, #tpu.memory_space<vmem>>, vector<16x128xf32>
      %19 = arith.index_cast %16 : i32 to index
      %c0_10 = arith.constant 0 : index
      %20 = vector.load %arg3[%19, %c0_10] : memref<16x128xf32, #tpu.memory_space<vmem>>, vector<16x128xf32>
      %21 = arith.mulf %18, %20 : vector<16x128xf32>
      %cst_11 = arith.constant 0.000000e+00 : f32
      %22 = vector.broadcast %cst_11 : f32 to vector<16x128xf32>
      %23 = arith.subf %22, %21 : vector<16x128xf32>
      %cst_12 = arith.constant 0.000000e+00 : f32
      %24 = vector.broadcast %cst_12 : f32 to vector<16x128xf32>
      %25 = arith.maximumf %23, %24 : vector<16x128xf32>
      %26 = math.absf %21 : vector<16x128xf32>
      %cst_13 = arith.constant 0.000000e+00 : f32
      %27 = vector.broadcast %cst_13 : f32 to vector<16x128xf32>
      %28 = arith.subf %27, %26 : vector<16x128xf32>
      %29 = math.exp %28 : vector<16x128xf32>
      %30 = math.log1p %29 : vector<16x128xf32>
      %31 = arith.addf %25, %30 : vector<16x128xf32>
      %32 = arith.addi %5, %16 : i32
      %33 = tpu.iota {dimensions = array<i32: 0>} : vector<16x128xi32>
      %34 = vector.broadcast %32 : i32 to vector<16x128xi32>
      %35 = arith.addi %34, %33 : vector<16x128xi32>
      %36 = tpu.iota {dimensions = array<i32: 1>} : vector<16x128xi32>
      %c16_i32_14 = arith.constant 16 : i32
      %37 = vector.broadcast %c16_i32_14 : i32 to vector<16x128xi32>
      %38 = arith.cmpi slt, %35, %37 : vector<16x128xi32>
      %c16_i32_15 = arith.constant 16 : i32
      %39 = vector.broadcast %c16_i32_15 : i32 to vector<16x128xi32>
      %40 = arith.cmpi eq, %35, %39 : vector<16x128xi32>
      %c0_i32_16 = arith.constant 0 : i32
      %41 = vector.broadcast %c0_i32_16 : i32 to vector<16x128xi32>
      %42 = arith.cmpi slt, %36, %41 : vector<16x128xi32>
      %43 = arith.andi %40, %42 : vector<16x128xi1>
      %44 = arith.ori %38, %43 : vector<16x128xi1>
      %cst_17 = arith.constant 0.000000e+00 : f32
      %45 = vector.broadcast %cst_17 : f32 to vector<16x128xf32>
      %46 = arith.select %44, %31, %45 : vector<16x128xi1>, vector<16x128xf32>
      %47 = vector.shape_cast %46 : vector<16x128xf32> to vector<2x8x128xf32>
      %cst_18 = arith.constant dense<0.000000e+00> : vector<8x128xf32>
      %48 = vector.multi_reduction <add>, %47, %cst_18 [0] : vector<2x8x128xf32> to vector<8x128xf32>
      %49 = arith.addf %14, %48 : vector<8x128xf32>
      %c1_i32_19 = arith.constant 1 : i32
      %50 = vector.shape_cast %49 : vector<8x128xf32> to vector<1x8x128xf32>
      %51 = arith.addf %13, %50 : vector<1x8x128xf32>
      %c0_20 = arith.constant 0 : index
      %c0_21 = arith.constant 0 : index
      %c0_22 = arith.constant 0 : index
      %52 = vector.load %arg4[%c0_20, %c0_21, %c0_22] : memref<1x8x128xf32, #tpu.memory_space<vmem>>, vector<1x8x128xf32>
      tpu.vector_store %arg4[%c0_20, %c0_21, %c0_22], %51 {strides = array<i32>} : memref<1x8x128xf32, #tpu.memory_space<vmem>>, vector<1x8x128xf32>,
    } else {
    }
    return
  }
  func.func @transform_0(%arg0: i32, %arg1: i32) -> (i32, i32) {
    %c1_i32 = arith.constant 1 : i32
    %0 = arith.muli %arg0, %c1_i32 : i32
    %1 = arith.addi %0, %arg1 : i32
    %c0_i32 = arith.constant 0 : i32
    %c0_i32_0 = arith.constant 0 : i32
    return %1, %c0_i32 : i32, i32
  }
  func.func @transform_1(%arg0: i32, %arg1: i32) -> (i32, i32) {
    %c1_i32 = arith.constant 1 : i32
    %0 = arith.muli %arg0, %c1_i32 : i32
    %1 = arith.addi %0, %arg1 : i32
    %c0_i32 = arith.constant 0 : i32
    %c0_i32_0 = arith.constant 0 : i32
    return %1, %c0_i32 : i32, i32
  }
  func.func @transform_2(%arg0: i32, %arg1: i32) -> (i32, i32, i32) {
    %c0_i32 = arith.constant 0 : i32
    %c0_i32_0 = arith.constant 0 : i32
    %c0_i32_1 = arith.constant 0 : i32
    return %arg0, %c0_i32, %c0_i32_0 : i32, i32, i32
  }
}

</mosaic_0001>

<llo_original>
// kernel: tpu_custom_call.1
$region0: #{tpu_custom_call.1}
  #allocation0 [shape = 'u32[]', space=smem, size = 0x4, offset = 0x4, fixed_abs, tag = 'smem constant byte address 0x4 - core index']
  #allocation1 [shape = 'u32[144,128]{1,0:T(1,128)}', space=vmem, size = 0x12000, scoped, tag = 'internal scratch']
  %s0 = inlined_call_operand.hbm [shape: f32[16,128], index: 0, kind: input, shape index: {}]
  %s1 = inlined_call_operand.hbm [shape: f32[16,128], index: 1, kind: input, shape index: {}]
  %s2 = inlined_call_operand.hbm [shape: f32[1,8,128], index: 2, kind: output, shape index: {}]
  %s3 = sld [smem:[#allocation0]]
  $region38: #{tpu_custom_call.1} parent=0
    _
  %s5 = ssub.s32 1, %s3
  %s6 = scalar_select 0, %s5, %s3
  $region1: #{tpu_custom_call.1} parent=0
    #allocation2 [shape = 'u8[8192]{0}', space=vmem, size = 0x2000, scoped, tag = 'input window, operand 0, single buffered']
    #allocation3 [shape = 's32[1]{0}', space=sflag, size = 0x4, scoped, tag = 'scoped memory for tpu_custom_call.1']
    #allocation4 [shape = 's32[1]{0}', space=sflag, size = 0x4, scoped, tag = 'scoped memory for tpu_custom_call.1']
    #allocation5 [shape = 'u8[8192]{0}', space=vmem, size = 0x2000, scoped, tag = 'input window, operand 1, single buffered']
    #allocation6 [shape = 's32[1]{0}', space=sflag, size = 0x4, scoped, tag = 'scoped memory for tpu_custom_call.1']
    #allocation7 [shape = 'u8[4096]{0}', space=vmem, size = 0x1000, scoped, tag = 'output window, operand 0, single buffered']
    %7 = vsyncpa [#allocation3], 0
    %8 = vsyncpa [#allocation6], 0
    %9 = vsyncpa [#allocation4], 0
    // Predicated region
    $region2: #{tpu_custom_call.1} parent=1 // pred_check
      _
    $region3: #{tpu_custom_call.1} parent=1 // pred_check_branch
      %11 = sbr.rel (0) target = $region5
    $region4: #{tpu_custom_call.1} parent=1 // pred_region
      %s12 = sadd.s32 0, 0
      %s13 = smul.u32 2, %s12
      %s15 = ssub.s32 256, 256
      %16 = vsyncadd [#allocation3], %s15
      %s17 = smul.addr %s13, 128
      %s18 = scalar_lea.hbm %s0, %s17
      %s19 = sshll.u32 [#allocation2], 4
      %s20 = int_to_ptr.vmem [resolvable:$true] %s19
      %25 = dma.hbm_to_vmem [thread:$0]  %s18, 256, %s20, [#allocation3], 128, 128, 8
    $region5: #{tpu_custom_call.1} parent=1 // pred_fallthru
      _
    // Predicated region
    $region6: #{tpu_custom_call.1} parent=1 // pred_check
      _
    $region7: #{tpu_custom_call.1} parent=1 // pred_check_branch
      %27 = sbr.rel (0) target = $region9
    $region8: #{tpu_custom_call.1} parent=1 // pred_region
      %s28 = sadd.s32 0, 0
      %s29 = smul.u32 2, %s28
      %s31 = ssub.s32 256, 256
      %32 = vsyncadd [#allocation6], %s31
      %s33 = smul.addr %s29, 128
      %s34 = scalar_lea.hbm %s1, %s33
      %s35 = sshll.u32 [#allocation5], 4
      %s36 = int_to_ptr.vmem [resolvable:$true] %s35
      %41 = dma.hbm_to_vmem [thread:$0]  %s34, 256, %s36, [#allocation6], 128, 128, 8
    $region9: #{tpu_custom_call.1} parent=1 // pred_fallthru
      _
    // Predicated region
    $region10: #{tpu_custom_call.1} parent=1 // pred_check
      _
    $region11: #{tpu_custom_call.1} parent=1 // pred_check_branch
      %43 = sbr.rel (0) target = $region13
    $region12: #{tpu_custom_call.1} parent=1 // pred_region
      %44 = dma.done [#allocation3], 256
    $region13: #{tpu_custom_call.1} parent=1 // pred_fallthru
      _
    // Predicated region
    $region14: #{tpu_custom_call.1} parent=1 // pred_check
      _
    $region15: #{tpu_custom_call.1} parent=1 // pred_check_branch
      %46 = sbr.rel (0) target = $region17
    $region16: #{tpu_custom_call.1} parent=1 // pred_region
      %47 = dma.done [#allocation6], 256
    $region17: #{tpu_custom_call.1} parent=1 // pred_fallthru
      _
    %s48 = sadd.s32 0, 0
    %s49 = smul.u32 2, %s48
    %s50 = sadd.s32 0, 0
    %s51 = smul.u32 2, %s50
    %p52 = scmp.eq.s32.totalorder 0, 0
    // Predicated region
    $region18: #{tpu_custom_call.1} parent=1 // pred_check
      %p53 = pneg %p52
    $region19: #{tpu_custom_call.1} parent=1 // pred_check_branch
      %55 = sbr.rel (%p53) target = $region21
    $region20: #{tpu_custom_call.1} parent=1 // pred_region
      %56 = vst [vmem:[#allocation7] sm:$0xff] 0.0
    $region21: #{tpu_custom_call.1} parent=1 // pred_fallthru
      _
    %s57 = sadd.s32 0, 0
    %s58 = smul.u32 %s57, 16
    %s59 = sadd.s32 %s58, 16
    %p60 = scmp.gt.s32.totalorder %s59, 16
    %p61 = scmp.le.s32.totalorder %s59, 16
    // Predicated region
    $region22: #{tpu_custom_call.1} parent=1 // pred_check
      %p62 = pneg %p61
    $region23: #{tpu_custom_call.1} parent=1 // pred_check_branch
      %64 = sbr.rel (%p62) target = $region25
    $region24: #{tpu_custom_call.1} parent=1 // pred_region
      %v65 = vld [vmem:[#allocation7] sm:$0xff]
      %v66 = vld [vmem:[#allocation2] sm:$0xff]
      %v67 = vld [vmem:[#allocation2 + $0x8] sm:$0xff]
      %v68 = vld [vmem:[#allocation5] sm:$0xff]
      %v69 = vld [vmem:[#allocation5 + $0x8] sm:$0xff]
      %v70 = vmul.f32 %v66, %v68
      %v71 = vmul.f32 %v67, %v69
      %v72 = vsub.f32 0.0, %v70
      %v73 = vsub.f32 0.0, %v71
      %v74 = vmax.f32 %v72, 0.0
      %v75 = vmax.f32 %v73, 0.0
      %v76 = vand.u32 2147483647, %v70
      %v77 = vand.u32 2147483647, %v71
      %v78 = vsub.f32 0.0, %v76
      %v79 = vsub.f32 0.0, %v77
      %v80 = vmul.f32 %v78, 1.442695
      %v81 = vpow.pop %v80
      %v82 = vmul.f32 %v79, 1.442695
      %v83 = vpow.pop %v82
      %v84 = vadd.f32 %v81, 1.0
      %v85 = vlog2.pop %v84
      %v86 = vmul.f32 %v85, 0.6931472
      %v87 = vmul.f32 -0.5, %v81
      %v88 = vadd.f32 %v87, 1.0
      %v89 = vmul.f32 %v88, %v81
      %v90 = vand.u32 2147483647, %v81
      %vm91 = vcmp.lt.f32.partialorder %v90, 0.0004427343
      %v92 = vsel %vm91, %v89, %v86
      %v93 = vadd.f32 %v83, 1.0
      %v94 = vlog2.pop %v93
      %v95 = vmul.f32 %v94, 0.6931472
      %v96 = vmul.f32 -0.5, %v83
      %v97 = vadd.f32 %v96, 1.0
      %v98 = vmul.f32 %v97, %v83
      %v99 = vand.u32 2147483647, %v83
      %vm100 = vcmp.lt.f32.partialorder %v99, 0.0004427343
      %v101 = vsel %vm100, %v98, %v95
      %v102 = vadd.f32 %v74, %v92
      %v103 = vadd.f32 %v75, %v101
      %v104 = vadd.f32 %v102, %v103
      %v105 = vadd.f32 %v104, 0.0
      %v106 = vadd.f32 %v65, %v105
      %107 = vst [vmem:[#allocation7] sm:$0xff] %v106
    $region25: #{tpu_custom_call.1} parent=1 // pred_fallthru
      _
    // Predicated region
    $region26: #{tpu_custom_call.1} parent=1 // pred_check
      %p108 = pneg %p60
    $region27: #{tpu_custom_call.1} parent=1 // pred_check_branch
      %110 = sbr.rel (%p108) target = $region29
    $region28: #{tpu_custom_call.1} parent=1 // pred_region
      %v111 = vld [vmem:[#allocation7] sm:$0xff]
      %v112 = vld [vmem:[#allocation2] sm:$0xff]
      %v113 = vld [vmem:[#allocation2 + $0x8] sm:$0xff]
      %v114 = vld [vmem:[#allocation5] sm:$0xff]
      %v115 = vld [vmem:[#allocation5 + $0x8] sm:$0xff]
      %v116 = vmul.f32 %v112, %v114
      %v117 = vmul.f32 %v113, %v115
      %v118 = vsub.f32 0.0, %v116
      %v119 = vsub.f32 0.0, %v117
      %v120 = vmax.f32 %v118, 0.0
      %v121 = vmax.f32 %v119, 0.0
      %v122 = vand.u32 2147483647, %v116
      %v123 = vand.u32 2147483647, %v117
      %v124 = vsub.f32 0.0, %v122
      %v125 = vsub.f32 0.0, %v123
      %v126 = vmul.f32 %v124, 1.442695
      %v127 = vpow.pop %v126
      %v128 = vmul.f32 %v125, 1.442695
      %v129 = vpow.pop %v128
      %v130 = vadd.f32 %v127, 1.0
      %v131 = vlog2.pop %v130
      %v132 = vmul.f32 %v131, 0.6931472
      %v133 = vmul.f32 -0.5, %v127
      %v134 = vadd.f32 %v133, 1.0
      %v135 = vmul.f32 %v134, %v127
      %v136 = vand.u32 2147483647, %v127
      %vm137 = vcmp.lt.f32.partialorder %v136, 0.0004427343
      %v138 = vsel %vm137, %v135, %v132
      %v139 = vadd.f32 %v129, 1.0
      %v140 = vlog2.pop %v139
      %v141 = vmul.f32 %v140, 0.6931472
      %v142 = vmul.f32 -0.5, %v129
      %v143 = vadd.f32 %v142, 1.0
      %v144 = vmul.f32 %v143, %v129
      %v145 = vand.u32 2147483647, %v129
      %vm146 = vcmp.lt.f32.partialorder %v145, 0.0004427343
      %v147 = vsel %vm146, %v144, %v141
      %v148 = vadd.f32 %v120, %v138
      %v149 = vadd.f32 %v121, %v147
      %s150 = sadd.s32 %s58, 0
      %v151 = vlaneseq
      %v152 = vshrl.u32 %v151, 7
      %v153 = vadd.s32 %v152, 8
      %v154 = vstv %s150
      %v155 = vadd.s32 %v154, %v152
      %v156 = vadd.s32 %v154, %v153
      %v157 = vlaneseq
      %v158 = vand.u32 %v157, 127
      %vm159 = vcmp.lt.s32.totalorder %v155, 16
      %vm160 = vcmp.lt.s32.totalorder %v156, 16
      %vm161 = vcmp.eq.s32.totalorder %v155, 16
      %vm162 = vcmp.eq.s32.totalorder %v156, 16
      %vm163 = vcmp.lt.s32.totalorder %v158, 0
      %vm164 = vmand %vm161, %vm163
      %vm165 = vmand %vm162, %vm163
      %vm166 = vmor %vm159, %vm164
      %vm167 = vmor %vm160, %vm165
      %v168 = vsel %vm166, %v148, 0.0
      %v169 = vsel %vm167, %v149, 0.0
      %v170 = vadd.f32 %v168, %v169
      %v171 = vadd.f32 %v170, 0.0
      %v172 = vadd.f32 %v111, %v171
      %173 = vst [vmem:[#allocation7] sm:$0xff] %v172
    $region29: #{tpu_custom_call.1} parent=1 // pred_fallthru
      _
    // Predicated region
    $region30: #{tpu_custom_call.1} parent=1 // pred_check
      _
    $region31: #{tpu_custom_call.1} parent=1 // pred_check_branch
      %175 = sbr.rel (0) target = $region33
    $region32: #{tpu_custom_call.1} parent=1 // pred_region
      %s177 = ssub.s32 128, 128
      %178 = vsyncadd [#allocation4], %s177
      %s180 = sshll.u32 [#allocation7], 4
      %s181 = int_to_ptr.vmem [resolvable:$true] %s180
      %183 = dma.vmem_to_hbm [thread:$0]  %s181, 128, %s2, [#allocation4]
    $region33: #{tpu_custom_call.1} parent=1 // pred_fallthru
      _
    // Predicated region
    $region34: #{tpu_custom_call.1} parent=1 // pred_check
      _
    $region35: #{tpu_custom_call.1} parent=1 // pred_check_branch
      %185 = sbr.rel (0) target = $region37
    $region36: #{tpu_custom_call.1} parent=1 // pred_region
      %186 = dma.done [#allocation4], 128
    $region37: #{tpu_custom_call.1} parent=1 // pred_fallthru
      _
    %187 = vsyncpa [#allocation3], 1
    %188 = vsyncpa [#allocation6], 1
    %189 = vsyncpa [#allocation4], 1

</llo_original>
